<compile_context>
chip_gen: v5e
topology: v5e:2x2
jax: 0.10.0
libtpu: 0.0.40
codegen_flags: <defaults>
</compile_context>

<pallas_src>
import math

import numpy as np
import jax
import jax.numpy as jnp
from jax.experimental import pallas as pl
from jax.experimental.pallas import tpu as pltpu


def _round_up(a, b):
    return (a + b - 1) // b * b


# ----------------------------------------------------------------------------
# Pallas kernel: fused (matmul + bias + ReLU) x num_layers, intermediates in VMEM
# ----------------------------------------------------------------------------
def _decoder_kernel(x_ref, *rest):
    # rest = (w1, b1, w2, b2, ..., wL, bL, o_ref)
    o_ref = rest[-1]
    wb = rest[:-1]
    n_layers = len(wb) // 2
    h = x_ref[...]                                   # (bm, D_in), compute dtype (bf16)
    for li in range(n_layers):
        w_ref, b_ref = wb[2 * li], wb[2 * li + 1]    # (K, D) compute dtype, (1, D) f32
        acc = jnp.dot(h, w_ref[...], preferred_element_type=jnp.float32)   # MXU, f32 acc
        acc = jnp.maximum(acc + b_ref[...], 0.0)     # bias + ReLU in f32 (VPU)
        if li + 1 < n_layers:
            h = acc.astype(wb[2 * (li + 1)].dtype)   # keep inter-layer activation bf16
        else:
            h = acc
    o_ref[...] = h.astype(o_ref.dtype)


def image_decoder_forward(x, folded_params, cfg, *, block_m=1024):
    """x: (N, in_features) f32 -> (N, C_out, H_out, W_out) f32."""
    N, d_in = x.shape
    d_out = int(folded_params[-1][0].shape[1])
    compute_dtype = folded_params[0][0].dtype
    itemsize = compute_dtype.itemsize
    row_align = 16 if itemsize == 2 else 8

    # --- tile sizing ---------------------------------------------------------
    # Clamp block_m so the per-step working set stays well inside v7x's 64 MiB
    # physical VMEM even at f32.
    block_m = max(row_align, min(int(block_m), 2048))
    n_aligned = _round_up(N, row_align)
    g = pl.cdiv(n_aligned, block_m)
    if n_aligned >= 2 * row_align:
        g = max(g, 2)                   # >=2 grid steps -> megacore shards on v7x
    bm = _round_up(pl.cdiv(n_aligned, g), row_align)
    n_pad = g * bm
    grid = (g,)

    # Cast input to the compute dtype (halves input DMA traffic for bf16) and
    # pad rows so every tile is full.
    xc = x.astype(compute_dtype)
    if n_pad != N:
        xc = jnp.pad(xc, ((0, n_pad - N), (0, 0)))

    in_specs = [pl.BlockSpec((bm, d_in), lambda i: (i, 0))]
    flat_args = [xc]
    for w, b in folded_params:
        k, d = w.shape
        in_specs.append(pl.BlockSpec((k, d), lambda i: (0, 0)))   # full weight block
        in_specs.append(pl.BlockSpec((1, d), lambda i: (0, 0)))   # full bias block
        flat_args += [w, b]
    out_specs = pl.BlockSpec((bm, d_out), lambda i: (i, 0))
    # TODO(synk): d_out=192 keeps one half-masked vst per row; padding the final
    # folded layer to 256 lanes would remove it but adds an HBM slice-copy
    # downstream, so it is intentionally not done (per the review).

    # --- explicit VMEM budget (v5e default scoped limit is only 16 MiB) ------
    max_d = max(int(w.shape[1]) for w, _ in folded_params)
    weights_bytes = sum(int(w.size) * w.dtype.itemsize + int(b.size) * b.dtype.itemsize
                        for w, b in folded_params)
    est = (2 * bm * d_in * itemsize          # double-buffered input tiles
           + 2 * bm * d_out * 4              # double-buffered output tiles (f32)
           + 2 * weights_bytes               # weight/bias blocks (2 buffers)
           + 4 * bm * max_d * 4)             # in-kernel temporaries, headroom
    vmem_limit = int(min(56 * 2**20, max(32 * 2**20, 2 * est)))

    flops = int(2 * n_pad * sum(int(w.shape[0]) * int(w.shape[1])
                                for w, _ in folded_params))
    bytes_accessed = int(n_pad * d_in * itemsize + weights_bytes + n_pad * d_out * 4)

    out = pl.pallas_call(
        _decoder_kernel,
        out_shape=jax.ShapeDtypeStruct((n_pad, d_out), jnp.float32),
        grid=grid,
        in_specs=in_specs,
        out_specs=out_specs,
        compiler_params=pltpu.CompilerParams(
            dimension_semantics=("parallel",),       # megacore sharding on v7x
            vmem_limit_bytes=vmem_limit),
        cost_estimate=pl.CostEstimate(
            flops=flops, transcendentals=0, bytes_accessed=bytes_accessed),
    )(*flat_args)

    c_out, h_out, w_out = cfg["output_chw"]
    return out[:N].reshape(N, c_out, h_out, w_out)   # NCHW, cheap row-major reshape


# ----------------------------------------------------------------------------
# One-time weight folding: Conv2d(3x3,'same') -> dense matrix, Upsample folded in
# ----------------------------------------------------------------------------
def _conv3x3_same_matrix(w_oihw, H, W):
    """Exact dense (Cin*H*W, Cout*H*W) equivalent of Conv2d(k=3, padding='same')
    acting on NCHW-flattened activations."""
    Cout, Cin, KH, KW = w_oihw.shape
    T = np.zeros((KH, KW, H * W, H * W), np.float32)
    for kh in range(KH):
        for kw in range(KW):
            for i in range(H):
                for j in range(W):
                    si, sj = i + kh - KH // 2, j + kw - KW // 2
                    if 0 <= si < H and 0 <= sj < W:
                        T[kh, kw, si * W + sj, i * W + j] = 1.0
    M = jnp.einsum("oikl,klqp->iqop", w_oihw, jnp.asarray(T),
                   precision=jax.lax.Precision.HIGHEST)
    return M.reshape(Cin * H * W, Cout * H * W)


def _upsample_nearest_matrix(C, H, W, s):
    """0/1 matrix mapping NCHW-flattened (C,H,W) -> nearest-upsampled (C,sH,sW)."""
    H2, W2 = H * s, W * s
    Us = np.zeros((H * W, H2 * W2), np.float32)
    for i2 in range(H2):
        for j2 in range(W2):
            Us[(i2 // s) * W + (j2 // s), i2 * W2 + j2] = 1.0
    return jnp.asarray(np.kron(np.eye(C, dtype=np.float32), Us))


def fold_decoder_params(params, cfg, dtype=jnp.bfloat16):
    """Fold each (conv weight, bias[, upsample]) into one dense (K, D) matrix + bias.

    Folding is done in f32 (exact); the matmul operand is then cast to `dtype`
    (bf16 = MXU-native fast path).  Biases stay f32 since bias+ReLU runs on the
    f32 accumulator inside the kernel.
    """
    s = cfg["upsample_scale"]
    folded = []
    for (w, b), meta in zip(params, cfg["layers"]):
        H, W, do_up = meta["H"], meta["W"], meta["do_up"]
        cout = w.shape[0]
        M = _conv3x3_same_matrix(w, H, W)
        if do_up:
            U = _upsample_nearest_matrix(cout, H, W, s)
            # ReLU commutes with pure 0/1 replication, so upsample folds in.
            M = jnp.dot(M, U, precision=jax.lax.Precision.HIGHEST)
            bb = jnp.repeat(b, (H * s) * (W * s))
        else:
            bb = jnp.repeat(b, H * W)
        folded.append((M.astype(dtype), bb.reshape(1, -1).astype(jnp.float32)))
    return folded


# ----------------------------------------------------------------------------
# Parameter construction mirroring the PyTorch module
# ----------------------------------------------------------------------------
def build_image_decoder(key, in_features=128, channels=(32, 16, 8, 3),
                        conv_kernel_size=3, upsample_scale=2, image_size=(8, 8)):
    assert conv_kernel_size == 3, "specialized for 3x3 convs"
    image_size_h, image_size_w = image_size
    height_rate = image_size_h / image_size_w
    initial_image_area = in_features / channels[0]
    initial_width = math.sqrt(initial_image_area / height_rate)
    initial_height = initial_image_area / initial_width
    c0, h0, w0 = channels[0], int(initial_height), int(initial_width)
    assert c0 * h0 * w0 == in_features, "in_features must equal C0*H0*W0"

    size_h = initial_height
    H, W = h0, w0
    params, layers = [], []
    for i in range(len(channels) - 1):
        cin, cout = channels[i], channels[i + 1]
        key, kw_, kb_ = jax.random.split(key, 3)
        # PyTorch Conv2d default init: U(-k, k), k = 1/sqrt(fan_in)
        bound = 1.0 / math.sqrt(cin * conv_kernel_size * conv_kernel_size)
        w = jax.random.uniform(kw_, (cout, cin, 3, 3), jnp.float32,
                               minval=-bound, maxval=bound)   # OIHW (PyTorch layout)
        b = jax.random.uniform(kb_, (cout,), jnp.float32,
                               minval=-bound, maxval=bound)
        params.append((w, b))
        do_up = not (size_h >= image_size_h and size_h >= image_size_w)
        layers.append(dict(cin=cin, cout=cout, H=H, W=W, do_up=do_up))
        if do_up:
            size_h *= upsample_scale
            H *= upsample_scale
            W *= upsample_scale

    cfg = dict(initial_image_size=(c0, h0, w0),
               layers=layers,
               upsample_scale=upsample_scale,
               output_chw=(channels[-1], H, W))
    return params, cfg


# ----------------------------------------------------------------------------
# Pure-JAX reference (direct translation of the PyTorch forward) for validation
# ----------------------------------------------------------------------------
def reference_forward(x, params, cfg):
    c0, h0, w0 = cfg["initial_image_size"]
    h = x.reshape(-1, c0, h0, w0)
    s = cfg["upsample_scale"]
    for (w, b), meta in zip(params, cfg["layers"]):
        y = jax.lax.conv_general_dilated(
            h, w, window_strides=(1, 1), padding="SAME",
            dimension_numbers=("NCHW", "OIHW", "NCHW"),
            precision=jax.lax.Precision.HIGHEST)
        h = jnp.maximum(y + b[None, :, None, None], 0.0)
        if meta["do_up"]:
            h = jnp.repeat(jnp.repeat(h, s, axis=2), s, axis=3)
    return h


if __name__ == "__main__":
    key = jax.random.PRNGKey(0)
    k_params, k_in = jax.random.split(key)

    # Small config consistent with the module's construction rules:
    #   in_features=128, channels[0]=32 -> initial image (32, 2, 2),
    #   two upsamples (2->4->8) reach image_size=(8, 8); output (N, 3, 8, 8).
    in_features = 128
    channels = (32, 16, 8, 3)
    image_size = (8, 8)
    batch = 2

    params, cfg = build_image_decoder(
        k_params, in_features=in_features, channels=channels,
        conv_kernel_size=3, upsample_scale=2, image_size=image_size)

    x = jax.random.normal(k_in, (batch, in_features), dtype=jnp.float32)
    ref = jax.block_until_ready(reference_forward(x, params, cfg))
    expected_shape = (batch, channels[-1], image_size[0], image_size[1])

    # f32 path: validates the conv->dense / upsample folding and kernel exactly.
    folded_f32 = fold_decoder_params(params, cfg, dtype=jnp.float32)
    fwd_f32 = jax.jit(lambda xx: image_decoder_forward(xx, folded_f32, cfg))
    out_f32 = jax.block_until_ready(fwd_f32(x))
    assert out_f32.shape == expected_shape, (out_f32.shape, expected_shape)
    assert out_f32.dtype == jnp.float32
    np.testing.assert_allclose(np.asarray(out_f32), np.asarray(ref),
                               rtol=1e-3, atol=1e-3)

    # bf16 fast path (MXU-native, f32 accumulation) - the production path.
    folded_bf16 = fold_decoder_params(params, cfg, dtype=jnp.bfloat16)
    fwd_bf16 = jax.jit(lambda xx: image_decoder_forward(xx, folded_bf16, cfg))
    out_bf16 = jax.block_until_ready(fwd_bf16(x))
    assert out_bf16.shape == expected_shape, (out_bf16.shape, expected_shape)
    assert out_bf16.dtype == jnp.float32
    # Tolerance reflects bf16 operand quantization (accumulation is f32).
    np.testing.assert_allclose(np.asarray(out_bf16), np.asarray(ref),
                               rtol=1.5e-2, atol=1.5e-2)

    print("KERNEL_OK")
</pallas_src>

<mosaic_0001>
module attributes {stable_mosaic.version = 11 : i64} {
  func.func @_decoder_kernel(%arg0: i32, %arg1: memref<8x128xf32, #tpu.memory_space<vmem>>, %arg2: memref<128x256xf32, #tpu.memory_space<vmem>>, %arg3: memref<1x256xf32, #tpu.memory_space<vmem>>, %arg4: memref<256x512xf32, #tpu.memory_space<vmem>>, %arg5: memref<1x512xf32, #tpu.memory_space<vmem>>, %arg6: memref<512x192xf32, #tpu.memory_space<vmem>>, %arg7: memref<1x192xf32, #tpu.memory_space<vmem>>, %arg8: memref<8x192xf32, #tpu.memory_space<vmem>>) attributes {dimension_semantics = [#tpu.dimension_semantics<parallel>], iteration_bounds = array<i64: 1>, scalar_prefetch = 0 : i64, scratch_operands = 0 : i64, tpu.core_type = #tpu.core_type<tc>, window_params = [{transform_indices = @transform_0, window_bounds = array<i64: 8, 128>}, {pipeline_mode = #tpu.pipeline_mode<synchronous>, transform_indices = @transform_1, window_bounds = array<i64: 128, 256>}, {pipeline_mode = #tpu.pipeline_mode<synchronous>, transform_indices = @transform_2, window_bounds = array<i64: 1, 256>}, {pipeline_mode = #tpu.pipeline_mode<synchronous>, transform_indices = @transform_3, window_bounds = array<i64: 256, 512>}, {pipeline_mode = #tpu.pipeline_mode<synchronous>, transform_indices = @transform_4, window_bounds = array<i64: 1, 512>}, {pipeline_mode = #tpu.pipeline_mode<synchronous>, transform_indices = @transform_5, window_bounds = array<i64: 512, 192>}, {pipeline_mode = #tpu.pipeline_mode<synchronous>, transform_indices = @transform_6, window_bounds = array<i64: 1, 192>}, {transform_indices = @transform_7, window_bounds = array<i64: 8, 192>}]} {
    %c0 = arith.constant 0 : index
    %c0_0 = arith.constant 0 : index
    %0 = vector.load %arg1[%c0, %c0_0] : memref<8x128xf32, #tpu.memory_space<vmem>>, vector<8x128xf32>
    %c0_1 = arith.constant 0 : index
    %c0_2 = arith.constant 0 : index
    %1 = vector.load %arg2[%c0_1, %c0_2] : memref<128x256xf32, #tpu.memory_space<vmem>>, vector<128x256xf32>
    %cst = arith.constant dense<0.000000e+00> : vector<8x256xf32>
    %2 = tpu.matmul %0, %1, %cst {dimension_numbers = #tpu.dot_dimension_numbers<[1], [0], [0], [1], [0, 0, 1, 1], [], []>} : vector<8x128xf32>, vector<128x256xf32>, vector<8x256xf32> -> vector<8x256xf32>
    %c0_3 = arith.constant 0 : index
    %c0_4 = arith.constant 0 : index
    %3 = vector.load %arg3[%c0_3, %c0_4] : memref<1x256xf32, #tpu.memory_space<vmem>>, vector<1x256xf32>
    %4 = vector.broadcast %3 : vector<1x256xf32> to vector<8x256xf32>
    %5 = arith.addf %2, %4 : vector<8x256xf32>
    %cst_5 = arith.constant 0.000000e+00 : f32
    %6 = vector.broadcast %cst_5 : f32 to vector<8x256xf32>
    %7 = arith.maximumf %5, %6 : vector<8x256xf32>
    %c0_6 = arith.constant 0 : index
    %c0_7 = arith.constant 0 : index
    %8 = vector.load %arg4[%c0_6, %c0_7] : memref<256x512xf32, #tpu.memory_space<vmem>>, vector<256x512xf32>
    %cst_8 = arith.constant dense<0.000000e+00> : vector<8x512xf32>
    %9 = tpu.matmul %7, %8, %cst_8 {dimension_numbers = #tpu.dot_dimension_numbers<[1], [0], [0], [1], [0, 0, 1, 1], [], []>} : vector<8x256xf32>, vector<256x512xf32>, vector<8x512xf32> -> vector<8x512xf32>
    %c0_9 = arith.constant 0 : index
    %c0_10 = arith.constant 0 : index
    %10 = vector.load %arg5[%c0_9, %c0_10] : memref<1x512xf32, #tpu.memory_space<vmem>>, vector<1x512xf32>
    %11 = vector.broadcast %10 : vector<1x512xf32> to vector<8x512xf32>
    %12 = arith.addf %9, %11 : vector<8x512xf32>
    %cst_11 = arith.constant 0.000000e+00 : f32
    %13 = vector.broadcast %cst_11 : f32 to vector<8x512xf32>
    %14 = arith.maximumf %12, %13 : vector<8x512xf32>
    %c0_12 = arith.constant 0 : index
    %c0_13 = arith.constant 0 : index
    %15 = vector.load %arg6[%c0_12, %c0_13] : memref<512x192xf32, #tpu.memory_space<vmem>>, vector<512x192xf32>
    %cst_14 = arith.constant dense<0.000000e+00> : vector<8x192xf32>
    %16 = tpu.matmul %14, %15, %cst_14 {dimension_numbers = #tpu.dot_dimension_numbers<[1], [0], [0], [1], [0, 0, 1, 1], [], []>} : vector<8x512xf32>, vector<512x192xf32>, vector<8x192xf32> -> vector<8x192xf32>
    %c0_15 = arith.constant 0 : index
    %c0_16 = arith.constant 0 : index
    %17 = vector.load %arg7[%c0_15, %c0_16] : memref<1x192xf32, #tpu.memory_space<vmem>>, vector<1x192xf32>
    %18 = vector.broadcast %17 : vector<1x192xf32> to vector<8x192xf32>
    %19 = arith.addf %16, %18 : vector<8x192xf32>
    %cst_17 = arith.constant 0.000000e+00 : f32
    %20 = vector.broadcast %cst_17 : f32 to vector<8x192xf32>
    %21 = arith.maximumf %19, %20 : vector<8x192xf32>
    %c0_18 = arith.constant 0 : index
    %c0_19 = arith.constant 0 : index
    %22 = vector.load %arg8[%c0_18, %c0_19] : memref<8x192xf32, #tpu.memory_space<vmem>>, vector<8x192xf32>
    tpu.vector_store %arg8[%c0_18, %c0_19], %21 {strides = array<i32>} : memref<8x192xf32, #tpu.memory_space<vmem>>, vector<8x192xf32>,
    return
  }
  func.func @transform_0(%arg0: i32) -> (i32, i32) {
    %c0_i32 = arith.constant 0 : i32
    %c0_i32_0 = arith.constant 0 : i32
    return %arg0, %c0_i32 : i32, i32
  }
  func.func @transform_1(%arg0: i32) -> (i32, i32) {
    %c0_i32 = arith.constant 0 : i32
    %c0_i32_0 = arith.constant 0 : i32
    %c0_i32_1 = arith.constant 0 : i32
    return %c0_i32, %c0_i32_0 : i32, i32
  }
  func.func @transform_2(%arg0: i32) -> (i32, i32) {
    %c0_i32 = arith.constant 0 : i32
    %c0_i32_0 = arith.constant 0 : i32
    %c0_i32_1 = arith.constant 0 : i32
    return %c0_i32, %c0_i32_0 : i32, i32
  }
  func.func @transform_3(%arg0: i32) -> (i32, i32) {
    %c0_i32 = arith.constant 0 : i32
    %c0_i32_0 = arith.constant 0 : i32
    %c0_i32_1 = arith.constant 0 : i32
    return %c0_i32, %c0_i32_0 : i32, i32
  }
  func.func @transform_4(%arg0: i32) -> (i32, i32) {
    %c0_i32 = arith.constant 0 : i32
    %c0_i32_0 = arith.constant 0 : i32
    %c0_i32_1 = arith.constant 0 : i32
    return %c0_i32, %c0_i32_0 : i32, i32
  }
  func.func @transform_5(%arg0: i32) -> (i32, i32) {
    %c0_i32 = arith.constant 0 : i32
    %c0_i32_0 = arith.constant 0 : i32
    %c0_i32_1 = arith.constant 0 : i32
    return %c0_i32, %c0_i32_0 : i32, i32
  }
  func.func @transform_6(%arg0: i32) -> (i32, i32) {
    %c0_i32 = arith.constant 0 : i32
    %c0_i32_0 = arith.constant 0 : i32
    %c0_i32_1 = arith.constant 0 : i32
    return %c0_i32, %c0_i32_0 : i32, i32
  }
  func.func @transform_7(%arg0: i32) -> (i32, i32) {
    %c0_i32 = arith.constant 0 : i32
    %c0_i32_0 = arith.constant 0 : i32
    return %arg0, %c0_i32 : i32, i32
  }
}

</mosaic_0001>

<llo_original>
// kernel: _lambda_.1
$region0: #{_lambda_.1}
  #allocation0 [shape = 'u32[]', space=smem, size = 0x4, offset = 0x4, fixed_abs, tag = 'smem constant byte address 0x4 - core index']
  #allocation1 [shape = 'u32[72,128]{1,0:T(1,128)}', space=vmem, size = 0x9000, scoped, tag = 'internal scratch']
  %s0 = inlined_call_operand.vmem [shape: f32[8,128], index: 0, kind: input, shape index: {}]
  %s1 = inlined_call_operand.hbm [shape: f32[128,256], index: 1, kind: input, shape index: {}]
  %s2 = inlined_call_operand.vmem [shape: f32[1,256], index: 2, kind: input, shape index: {}]
  %s3 = inlined_call_operand.hbm [shape: f32[256,512], index: 3, kind: input, shape index: {}]
  %s4 = inlined_call_operand.vmem [shape: f32[1,512], index: 4, kind: input, shape index: {}]
  %s5 = inlined_call_operand.hbm [shape: f32[512,192], index: 5, kind: input, shape index: {}]
  %s6 = inlined_call_operand.vmem [shape: f32[1,192], index: 6, kind: input, shape index: {}]
  %s7 = inlined_call_operand.vmem [shape: f32[8,192], index: 7, kind: output, shape index: {}]
  %s8 = sld [smem:[#allocation0]]
  $region50: #{_lambda_.1} parent=0
    _
  %s10 = ssub.s32 1, %s8
  %s11 = scalar_select 0, %s10, %s8
  $region1: #{_lambda_.1} parent=0
    #allocation2 [shape = 'u8[131072]{0}', space=vmem, size = 0x20000, scoped, tag = 'input window, operand 1, single buffered']
    #allocation3 [shape = 's32[1]{0}', space=sflag, size = 0x4, scoped, tag = 'scoped memory for _lambda_.1']
    #allocation4 [shape = 'u8[524288]{0}', space=vmem, size = 0x80000, scoped, tag = 'input window, operand 3, single buffered']
    #allocation5 [shape = 's32[1]{0}', space=sflag, size = 0x4, scoped, tag = 'scoped memory for _lambda_.1']
    #allocation6 [shape = 'u8[524288]{0}', space=vmem, size = 0x80000, scoped, tag = 'input window, operand 5, single buffered']
    %12 = vsyncpa [#allocation3], 0
    %13 = vsyncpa [#allocation5], 0
    // Predicated region
    $region2: #{_lambda_.1} parent=1 // pred_check
      _
    $region3: #{_lambda_.1} parent=1 // pred_check_branch
      %15 = sbr.rel (0) target = $region5
    $region4: #{_lambda_.1} parent=1 // pred_region
      _
    $region5: #{_lambda_.1} parent=1 // pred_fallthru
      _
    // Predicated region
    $region6: #{_lambda_.1} parent=1 // pred_check
      _
    $region7: #{_lambda_.1} parent=1 // pred_check_branch
      %17 = sbr.rel (0) target = $region9
    $region8: #{_lambda_.1} parent=1 // pred_region
      %19 = vsyncadd [#allocation3], 0
      %s20 = sshll.u32 %s1, 4
      %s21 = int_to_ptr.hbm [resolvable:$true] %s20
      %s22 = sshll.u32 [#allocation2], 4
      %s23 = int_to_ptr.vmem [resolvable:$true] %s22
      %28 = dma.hbm_to_vmem [thread:$0]  %s21, 4096, %s23, [#allocation3], 256, 256, 16
    $region9: #{_lambda_.1} parent=1 // pred_fallthru
      _
    // Predicated region
    $region10: #{_lambda_.1} parent=1 // pred_check
      _
    $region11: #{_lambda_.1} parent=1 // pred_check_branch
      %30 = sbr.rel (0) target = $region13
    $region12: #{_lambda_.1} parent=1 // pred_region
      _
    $region13: #{_lambda_.1} parent=1 // pred_fallthru
      _
    // Predicated region
    $region14: #{_lambda_.1} parent=1 // pred_check
      _
    $region15: #{_lambda_.1} parent=1 // pred_check_branch
      %32 = sbr.rel (0) target = $region17
    $region16: #{_lambda_.1} parent=1 // pred_region
      %34 = vsyncadd [#allocation5], 0
      %s35 = sshll.u32 %s3, 4
      %s36 = int_to_ptr.hbm [resolvable:$true] %s35
      %s37 = sshll.u32 [#allocation4], 4
      %s38 = int_to_ptr.vmem [resolvable:$true] %s37
      %43 = dma.hbm_to_vmem [thread:$0]  %s36, 16384, %s38, [#allocation5], 512, 512, 32
    $region17: #{_lambda_.1} parent=1 // pred_fallthru
      _
    // Predicated region
    $region18: #{_lambda_.1} parent=1 // pred_check
      _
    $region19: #{_lambda_.1} parent=1 // pred_check_branch
      %45 = sbr.rel (0) target = $region21
    $region20: #{_lambda_.1} parent=1 // pred_region
      _
    $region21: #{_lambda_.1} parent=1 // pred_fallthru
      _
    // Predicated region
    $region22: #{_lambda_.1} parent=1 // pred_check
      _
    $region23: #{_lambda_.1} parent=1 // pred_check_branch
      %47 = sbr.rel (0) target = $region25
    $region24: #{_lambda_.1} parent=1 // pred_region
      %49 = vsyncadd [#allocation5], 0
      %s50 = sshll.u32 %s5, 4
      %s51 = int_to_ptr.hbm [resolvable:$true] %s50
      %s52 = sshll.u32 [#allocation6], 4
      %s53 = int_to_ptr.vmem [resolvable:$true] %s52
      %58 = dma.hbm_to_vmem [thread:$0]  %s51, 16384, %s53, [#allocation5], 256, 256, 16
    $region25: #{_lambda_.1} parent=1 // pred_fallthru
      _
    // Predicated region
    $region26: #{_lambda_.1} parent=1 // pred_check
      _
    $region27: #{_lambda_.1} parent=1 // pred_check_branch
      %60 = sbr.rel (0) target = $region29
    $region28: #{_lambda_.1} parent=1 // pred_region
      _
    $region29: #{_lambda_.1} parent=1 // pred_fallthru
      _
    // Predicated region
    $region30: #{_lambda_.1} parent=1 // pred_check
      _
    $region31: #{_lambda_.1} parent=1 // pred_check_branch
      %62 = sbr.rel (0) target = $region33
    $region32: #{_lambda_.1} parent=1 // pred_region
      %64 = dma.done [#allocation3], 4096
    $region33: #{_lambda_.1} parent=1 // pred_fallthru
      _
    // Predicated region
    $region34: #{_lambda_.1} parent=1 // pred_check
      _
    $region35: #{_lambda_.1} parent=1 // pred_check_branch
      %66 = sbr.rel (0) target = $region37
    $region36: #{_lambda_.1} parent=1 // pred_region
      %68 = dma.done [#allocation5], 16384
    $region37: #{_lambda_.1} parent=1 // pred_fallthru
      _
    // Predicated region
    $region38: #{_lambda_.1} parent=1 // pred_check
      _
    $region39: #{_lambda_.1} parent=1 // pred_check_branch
      %70 = sbr.rel (0) target = $region41
    $region40: #{_lambda_.1} parent=1 // pred_region
      %72 = dma.done [#allocation5], 16384
    $region41: #{_lambda_.1} parent=1 // pred_fallthru
      _
    %v73 = vld [vmem:[%s0] sm:$0xff]
    %v74 = vld [vmem:[#allocation2] sm:$0xff]
    %v75 = vld [vmem:[#allocation2 + $0x8] sm:$0xff]
    %v76 = vld [vmem:[#allocation2 + $0x10] sm:$0xff]
    %v77 = vld [vmem:[#allocation2 + $0x18] sm:$0xff]
    %v78 = vld [vmem:[#allocation2 + $0x20] sm:$0xff]
    %v79 = vld [vmem:[#allocation2 + $0x28] sm:$0xff]
    %v80 = vld [vmem:[#allocation2 + $0x30] sm:$0xff]
    %v81 = vld [vmem:[#allocation2 + $0x38] sm:$0xff]
    %v82 = vld [vmem:[#allocation2 + $0x40] sm:$0xff]
    %v83 = vld [vmem:[#allocation2 + $0x48] sm:$0xff]
    %v84 = vld [vmem:[#allocation2 + $0x50] sm:$0xff]
    %v85 = vld [vmem:[#allocation2 + $0x58] sm:$0xff]
    %v86 = vld [vmem:[#allocation2 + $0x60] sm:$0xff]
    %v87 = vld [vmem:[#allocation2 + $0x68] sm:$0xff]
    %v88 = vld [vmem:[#allocation2 + $0x70] sm:$0xff]
    %v89 = vld [vmem:[#allocation2 + $0x78] sm:$0xff]
    %v90 = vld [vmem:[#allocation2 + $0x80] sm:$0xff]
    %v91 = vld [vmem:[#allocation2 + $0x88] sm:$0xff]
    %v92 = vld [vmem:[#allocation2 + $0x90] sm:$0xff]
    %v93 = vld [vmem:[#allocation2 + $0x98] sm:$0xff]
    %v94 = vld [vmem:[#allocation2 + $0xa0] sm:$0xff]
    %v95 = vld [vmem:[#allocation2 + $0xa8] sm:$0xff]
    %v96 = vld [vmem:[#allocation2 + $0xb0] sm:$0xff]
    %v97 = vld [vmem:[#allocation2 + $0xb8] sm:$0xff]
    %v98 = vld [vmem:[#allocation2 + $0xc0] sm:$0xff]
    %v99 = vld [vmem:[#allocation2 + $0xc8] sm:$0xff]
    %v100 = vld [vmem:[#allocation2 + $0xd0] sm:$0xff]
    %v101 = vld [vmem:[#allocation2 + $0xd8] sm:$0xff]
    %v102 = vld [vmem:[#allocation2 + $0xe0] sm:$0xff]
    %v103 = vld [vmem:[#allocation2 + $0xe8] sm:$0xff]
    %v104 = vld [vmem:[#allocation2 + $0xf0] sm:$0xff]
    %v105 = vld [vmem:[#allocation2 + $0xf8] sm:$0xff]
    %v106 = vld [vmem:[%s2] sm:$0x3]
    %v108 = vperm.slane %v106, 0
    %v109 = vperm.slane %v106, 1
    %112 = vmatpush.msra.mxu0 %v104
    %113 = vmatpush.msra.mxu0 %v102
    %114 = vmatpush.msra.mxu0 %v100
    %115 = vmatpush.msra.mxu0 %v98
    %116 = vmatpush.msra.mxu0 %v96
    %117 = vmatpush.msra.mxu0 %v94
    %118 = vmatpush.msra.mxu0 %v92
    %119 = vmatpush.msra.mxu0 %v90
    %120 = vmatpush.msra.mxu0 %v88
    %121 = vmatpush.msra.mxu0 %v86
    %122 = vmatpush.msra.mxu0 %v84
    %123 = vmatpush.msra.mxu0 %v82
    %124 = vmatpush.msra.mxu0 %v80
    %125 = vmatpush.msra.mxu0 %v78
    %126 = vmatpush.msra.mxu0 %v76
    %127 = vmatpush.msra.mxu0 %v74
    %128 = vmatmul.f32.gmra.mxu0 %v73
    %v129 = vpop.f32.mrf.mxu0
    %v130 = vadd.f32 %v108, %v129
    %131 = vdwg.mxu0
    %132 = vmatpush.msra.mxu0 %v105
    %133 = vmatpush.msra.mxu0 %v103
    %134 = vmatpush.msra.mxu0 %v101
    %135 = vmatpush.msra.mxu0 %v99
    %136 = vmatpush.msra.mxu0 %v97
    %137 = vmatpush.msra.mxu0 %v95
    %138 = vmatpush.msra.mxu0 %v93
    %139 = vmatpush.msra.mxu0 %v91
    %140 = vmatpush.msra.mxu0 %v89
    %141 = vmatpush.msra.mxu0 %v87
    %142 = vmatpush.msra.mxu0 %v85
    %143 = vmatpush.msra.mxu0 %v83
    %144 = vmatpush.msra.mxu0 %v81
    %145 = vmatpush.msra.mxu0 %v79
    %146 = vmatpush.msra.mxu0 %v77
    %147 = vmatpush.msra.mxu0 %v75
    %148 = vmatmul.f32.gmra.mxu0 %v73
    %v149 = vpop.f32.mrf.mxu0
    %v150 = vadd.f32 %v109, %v149
    %151 = vdwg.mxu0
    %v152 = vmax.f32 %v130, 0.0
    %v153 = vmax.f32 %v150, 0.0
    %v154 = vld [vmem:[#allocation4] sm:$0xff]
    %v155 = vld [vmem:[#allocation4 + $0x8] sm:$0xff]
    %v156 = vld [vmem:[#allocation4 + $0x10] sm:$0xff]
    %v157 = vld [vmem:[#allocation4 + $0x18] sm:$0xff]
    %v158 = vld [vmem:[#allocation4 + $0x20] sm:$0xff]
    %v159 = vld [vmem:[#allocation4 + $0x28] sm:$0xff]
    %v160 = vld [vmem:[#allocation4 + $0x30] sm:$0xff]
    %v161 = vld [vmem:[#allocation4 + $0x38] sm:$0xff]
    %v162 = vld [vmem:[#allocation4 + $0x40] sm:$0xff]
    %v163 = vld [vmem:[#allocation4 + $0x48] sm:$0xff]
    %v164 = vld [vmem:[#allocation4 + $0x50] sm:$0xff]
    %v165 = vld [vmem:[#allocation4 + $0x58] sm:$0xff]
    %v166 = vld [vmem:[#allocation4 + $0x60] sm:$0xff]
    %v167 = vld [vmem:[#allocation4 + $0x68] sm:$0xff]
    %v168 = vld [vmem:[#allocation4 + $0x70] sm:$0xff]
    %v169 = vld [vmem:[#allocation4 + $0x78] sm:$0xff]
    %v170 = vld [vmem:[#allocation4 + $0x80] sm:$0xff]
    %v171 = vld [vmem:[#allocation4 + $0x88] sm:$0xff]
    %v172 = vld [vmem:[#allocation4 + $0x90] sm:$0xff]
    %v173 = vld [vmem:[#allocation4 + $0x98] sm:$0xff]
    %v174 = vld [vmem:[#allocation4 + $0xa0] sm:$0xff]
    %v175 = vld [vmem:[#allocation4 + $0xa8] sm:$0xff]
    %v176 = vld [vmem:[#allocation4 + $0xb0] sm:$0xff]
    %v177 = vld [vmem:[#allocation4 + $0xb8] sm:$0xff]
    %v178 = vld [vmem:[#allocation4 + $0xc0] sm:$0xff]
    %v179 = vld [vmem:[#allocation4 + $0xc8] sm:$0xff]
    %v180 = vld [vmem:[#allocation4 + $0xd0] sm:$0xff]
    %v181 = vld [vmem:[#allocation4 + $0xd8] sm:$0xff]
    %v182 = vld [vmem:[#allocation4 + $0xe0] sm:$0xff]
    %v183 = vld [vmem:[#allocation4 + $0xe8] sm:$0xff]
    %v184 = vld [vmem:[#allocation4 + $0xf0] sm:$0xff]
    %v185 = vld [vmem:[#allocation4 + $0xf8] sm:$0xff]
    %v186 = vld [vmem:[#allocation4 + $0x100] sm:$0xff]
    %v187 = vld [vmem:[#allocation4 + $0x108] sm:$0xff]
    %v188 = vld [vmem:[#allocation4 + $0x110] sm:$0xff]
    %v189 = vld [vmem:[#allocation4 + $0x118] sm:$0xff]
    %v190 = vld [vmem:[#allocation4 + $0x120] sm:$0xff]
    %v191 = vld [vmem:[#allocation4 + $0x128] sm:$0xff]
    %v192 = vld [vmem:[#allocation4 + $0x130] sm:$0xff]
    %v193 = vld [vmem:[#allocation4 + $0x138] sm:$0xff]
    %v194 = vld [vmem:[#allocation4 + $0x140] sm:$0xff]
    %v195 = vld [vmem:[#allocation4 + $0x148] sm:$0xff]
    %v196 = vld [vmem:[#allocation4 + $0x150] sm:$0xff]
    %v197 = vld [vmem:[#allocation4 + $0x158] sm:$0xff]
    %v198 = vld [vmem:[#allocation4 + $0x160] sm:$0xff]
    %v199 = vld [vmem:[#allocation4 + $0x168] sm:$0xff]
    %v200 = vld [vmem:[#allocation4 + $0x170] sm:$0xff]
    %v201 = vld [vmem:[#allocation4 + $0x178] sm:$0xff]
    %v202 = vld [vmem:[#allocation4 + $0x180] sm:$0xff]
    %v203 = vld [vmem:[#allocation4 + $0x188] sm:$0xff]
    %v204 = vld [vmem:[#allocation4 + $0x190] sm:$0xff]
    %v205 = vld [vmem:[#allocation4 + $0x198] sm:$0xff]
    %v206 = vld [vmem:[#allocation4 + $0x1a0] sm:$0xff]
    %v207 = vld [vmem:[#allocation4 + $0x1a8] sm:$0xff]
    %v208 = vld [vmem:[#allocation4 + $0x1b0] sm:$0xff]
    %v209 = vld [vmem:[#allocation4 + $0x1b8] sm:$0xff]
    %v210 = vld [vmem:[#allocation4 + $0x1c0] sm:$0xff]
    %v211 = vld [vmem:[#allocation4 + $0x1c8] sm:$0xff]
    %v212 = vld [vmem:[#allocation4 + $0x1d0] sm:$0xff]
    %v213 = vld [vmem:[#allocation4 + $0x1d8] sm:$0xff]
    %v214 = vld [vmem:[#allocation4 + $0x1e0] sm:$0xff]
    %v215 = vld [vmem:[#allocation4 + $0x1e8] sm:$0xff]
    %v216 = vld [vmem:[#allocation4 + $0x1f0] sm:$0xff]
    %v217 = vld [vmem:[#allocation4 + $0x1f8] sm:$0xff]
    %v218 = vld [vmem:[#allocation4 + $0x200] sm:$0xff]
    %v219 = vld [vmem:[#allocation4 + $0x208] sm:$0xff]
    %v220 = vld [vmem:[#allocation4 + $0x210] sm:$0xff]
    %v221 = vld [vmem:[#allocation4 + $0x218] sm:$0xff]
    %v222 = vld [vmem:[#allocation4 + $0x220] sm:$0xff]
    %v223 = vld [vmem:[#allocation4 + $0x228] sm:$0xff]
    %v224 = vld [vmem:[#allocation4 + $0x230] sm:$0xff]
    %v225 = vld [vmem:[#allocation4 + $0x238] sm:$0xff]
    %v226 = vld [vmem:[#allocation4 + $0x240] sm:$0xff]
    %v227 = vld [vmem:[#allocation4 + $0x248] sm:$0xff]
    %v228 = vld [vmem:[#allocation4 + $0x250] sm:$0xff]
    %v229 = vld [vmem:[#allocation4 + $0x258] sm:$0xff]
    %v230 = vld [vmem:[#allocation4 + $0x260] sm:$0xff]
    %v231 = vld [vmem:[#allocation4 + $0x268] sm:$0xff]
    %v232 = vld [vmem:[#allocation4 + $0x270] sm:$0xff]
    %v233 = vld [vmem:[#allocation4 + $0x278] sm:$0xff]
    %v234 = vld [vmem:[#allocation4 + $0x280] sm:$0xff]
    %v235 = vld [vmem:[#allocation4 + $0x288] sm:$0xff]
    %v236 = vld [vmem:[#allocation4 + $0x290] sm:$0xff]
    %v237 = vld [vmem:[#allocation4 + $0x298] sm:$0xff]
    %v238 = vld [vmem:[#allocation4 + $0x2a0] sm:$0xff]
    %v239 = vld [vmem:[#allocation4 + $0x2a8] sm:$0xff]
    %v240 = vld [vmem:[#allocation4 + $0x2b0] sm:$0xff]
    %v241 = vld [vmem:[#allocation4 + $0x2b8] sm:$0xff]
    %v242 = vld [vmem:[#allocation4 + $0x2c0] sm:$0xff]
    %v243 = vld [vmem:[#allocation4 + $0x2c8] sm:$0xff]
    %v244 = vld [vmem:[#allocation4 + $0x2d0] sm:$0xff]
    %v245 = vld [vmem:[#allocation4 + $0x2d8] sm:$0xff]
    %v246 = vld [vmem:[#allocation4 + $0x2e0] sm:$0xff]
    %v247 = vld [vmem:[#allocation4 + $0x2e8] sm:$0xff]
    %v248 = vld [vmem:[#allocation4 + $0x2f0] sm:$0xff]
    %v249 = vld [vmem:[#allocation4 + $0x2f8] sm:$0xff]
    %v250 = vld [vmem:[#allocation4 + $0x300] sm:$0xff]
    %v251 = vld [vmem:[#allocation4 + $0x308] sm:$0xff]
    %v252 = vld [vmem:[#allocation4 + $0x310] sm:$0xff]
    %v253 = vld [vmem:[#allocation4 + $0x318] sm:$0xff]
    %v254 = vld [vmem:[#allocation4 + $0x320] sm:$0xff]
    %v255 = vld [vmem:[#allocation4 + $0x328] sm:$0xff]
    %v256 = vld [vmem:[#allocation4 + $0x330] sm:$0xff]
    %v257 = vld [vmem:[#allocation4 + $0x338] sm:$0xff]
    %v258 = vld [vmem:[#allocation4 + $0x340] sm:$0xff]
    %v259 = vld [vmem:[#allocation4 + $0x348] sm:$0xff]
    %v260 = vld [vmem:[#allocation4 + $0x350] sm:$0xff]
    %v261 = vld [vmem:[#allocation4 + $0x358] sm:$0xff]
    %v262 = vld [vmem:[#allocation4 + $0x360] sm:$0xff]
    %v263 = vld [vmem:[#allocation4 + $0x368] sm:$0xff]
    %v264 = vld [vmem:[#allocation4 + $0x370] sm:$0xff]
    %v265 = vld [vmem:[#allocation4 + $0x378] sm:$0xff]
    %v266 = vld [vmem:[#allocation4 + $0x380] sm:$0xff]
    %v267 = vld [vmem:[#allocation4 + $0x388] sm:$0xff]
    %v268 = vld [vmem:[#allocation4 + $0x390] sm:$0xff]
    %v269 = vld [vmem:[#allocation4 + $0x398] sm:$0xff]
    %v270 = vld [vmem:[#allocation4 + $0x3a0] sm:$0xff]
    %v271 = vld [vmem:[#allocation4 + $0x3a8] sm:$0xff]
    %v272 = vld [vmem:[#allocation4 + $0x3b0] sm:$0xff]
    %v273 = vld [vmem:[#allocation4 + $0x3b8] sm:$0xff]
    %v274 = vld [vmem:[#allocation4 + $0x3c0] sm:$0xff]
    %v275 = vld [vmem:[#allocation4 + $0x3c8] sm:$0xff]
    %v276 = vld [vmem:[#allocation4 + $0x3d0] sm:$0xff]
    %v277 = vld [vmem:[#allocation4 + $0x3d8] sm:$0xff]
    %v278 = vld [vmem:[#allocation4 + $0x3e0] sm:$0xff]
    %v279 = vld [vmem:[#allocation4 + $0x3e8] sm:$0xff]
    %v280 = vld [vmem:[#allocation4 + $0x3f0] sm:$0xff]
    %v281 = vld [vmem:[#allocation4 + $0x3f8] sm:$0xff]
    %v282 = vld [vmem:[%s4] sm:$0xf]
    %v284 = vperm.slane %v282, 0
    %v285 = vperm.slane %v282, 1
    %v286 = vperm.slane %v282, 2
    %v287 = vperm.slane %v282, 3
    %292 = vmatpush.msra.mxu0 %v214
    %293 = vmatpush.msra.mxu0 %v210
    %294 = vmatpush.msra.mxu0 %v206
    %295 = vmatpush.msra.mxu0 %v202
    %296 = vmatpush.msra.mxu0 %v198
    %297 = vmatpush.msra.mxu0 %v194
    %298 = vmatpush.msra.mxu0 %v190
    %299 = vmatpush.msra.mxu0 %v186
    %300 = vmatpush.msra.mxu0 %v182
    %301 = vmatpush.msra.mxu0 %v178
    %302 = vmatpush.msra.mxu0 %v174
    %303 = vmatpush.msra.mxu0 %v170
    %304 = vmatpush.msra.mxu0 %v166
    %305 = vmatpush.msra.mxu0 %v162
    %306 = vmatpush.msra.mxu0 %v158
    %307 = vmatpush.msra.mxu0 %v154
    %308 = vmatmul.f32.gmra.mxu0 %v152
    %v309 = vpop.f32.mrf.mxu0
    %v310 = vadd.f32 %v284, %v309
    %311 = vdwg.mxu0
    %312 = vmatpush.msra.mxu0 %v278
    %313 = vmatpush.msra.mxu0 %v274
    %314 = vmatpush.msra.mxu0 %v270
    %315 = vmatpush.msra.mxu0 %v266
    %316 = vmatpush.msra.mxu0 %v262
    %317 = vmatpush.msra.mxu0 %v258
    %318 = vmatpush.msra.mxu0 %v254
    %319 = vmatpush.msra.mxu0 %v250
    %320 = vmatpush.msra.mxu0 %v246
    %321 = vmatpush.msra.mxu0 %v242
    %322 = vmatpush.msra.mxu0 %v238
    %323 = vmatpush.msra.mxu0 %v234
    %324 = vmatpush.msra.mxu0 %v230
    %325 = vmatpush.msra.mxu0 %v226
    %326 = vmatpush.msra.mxu0 %v222
    %327 = vmatpush.msra.mxu0 %v218
    %328 = vmatmul.f32.gmra.mxu0 %v153
    %v329 = vpop.f32.mrf.mxu0
    %v330 = vadd.f32 %v310, %v329
    %331 = vdwg.mxu0
    %332 = vmatpush.msra.mxu0 %v215
    %333 = vmatpush.msra.mxu0 %v211
    %334 = vmatpush.msra.mxu0 %v207
    %335 = vmatpush.msra.mxu0 %v203
    %336 = vmatpush.msra.mxu0 %v199
    %337 = vmatpush.msra.mxu0 %v195
    %338 = vmatpush.msra.mxu0 %v191
    %339 = vmatpush.msra.mxu0 %v187
    %340 = vmatpush.msra.mxu0 %v183
    %341 = vmatpush.msra.mxu0 %v179
    %342 = vmatpush.msra.mxu0 %v175
    %343 = vmatpush.msra.mxu0 %v171
    %344 = vmatpush.msra.mxu0 %v167
    %345 = vmatpush.msra.mxu0 %v163
    %346 = vmatpush.msra.mxu0 %v159
    %347 = vmatpush.msra.mxu0 %v155
    %348 = vmatmul.f32.gmra.mxu0 %v152
    %v349 = vpop.f32.mrf.mxu0
    %v350 = vadd.f32 %v285, %v349
    %351 = vdwg.mxu0
    %352 = vmatpush.msra.mxu0 %v279
    %353 = vmatpush.msra.mxu0 %v275
    %354 = vmatpush.msra.mxu0 %v271
    %355 = vmatpush.msra.mxu0 %v267
    %356 = vmatpush.msra.mxu0 %v263
    %357 = vmatpush.msra.mxu0 %v259
    %358 = vmatpush.msra.mxu0 %v255
    %359 = vmatpush.msra.mxu0 %v251
    %360 = vmatpush.msra.mxu0 %v247
    %361 = vmatpush.msra.mxu0 %v243
    %362 = vmatpush.msra.mxu0 %v239
    %363 = vmatpush.msra.mxu0 %v235
    %364 = vmatpush.msra.mxu0 %v231
    %365 = vmatpush.msra.mxu0 %v227
    %366 = vmatpush.msra.mxu0 %v223
    %367 = vmatpush.msra.mxu0 %v219
    %368 = vmatmul.f32.gmra.mxu0 %v153
    %v369 = vpop.f32.mrf.mxu0
    %v370 = vadd.f32 %v350, %v369
    %371 = vdwg.mxu0
    %372 = vmatpush.msra.mxu0 %v216
    %373 = vmatpush.msra.mxu0 %v212
    %374 = vmatpush.msra.mxu0 %v208
    %375 = vmatpush.msra.mxu0 %v204
    %376 = vmatpush.msra.mxu0 %v200
    %377 = vmatpush.msra.mxu0 %v196
    %378 = vmatpush.msra.mxu0 %v192
    %379 = vmatpush.msra.mxu0 %v188
    %380 = vmatpush.msra.mxu0 %v184
    %381 = vmatpush.msra.mxu0 %v180
    %382 = vmatpush.msra.mxu0 %v176
    %383 = vmatpush.msra.mxu0 %v172
    %384 = vmatpush.msra.mxu0 %v168
    %385 = vmatpush.msra.mxu0 %v164
    %386 = vmatpush.msra.mxu0 %v160
    %387 = vmatpush.msra.mxu0 %v156
    %388 = vmatmul.f32.gmra.mxu0 %v152
    %v389 = vpop.f32.mrf.mxu0
    %v390 = vadd.f32 %v286, %v389
    %391 = vdwg.mxu0
    %392 = vmatpush.msra.mxu0 %v280
    %393 = vmatpush.msra.mxu0 %v276
    %394 = vmatpush.msra.mxu0 %v272
    %395 = vmatpush.msra.mxu0 %v268
    %396 = vmatpush.msra.mxu0 %v264
    %397 = vmatpush.msra.mxu0 %v260
    %398 = vmatpush.msra.mxu0 %v256
    %399 = vmatpush.msra.mxu0 %v252
    %400 = vmatpush.msra.mxu0 %v248
    %401 = vmatpush.msra.mxu0 %v244
    %402 = vmatpush.msra.mxu0 %v240
    %403 = vmatpush.msra.mxu0 %v236
    %404 = vmatpush.msra.mxu0 %v232
    %405 = vmatpush.msra.mxu0 %v228
    %406 = vmatpush.msra.mxu0 %v224
    %407 = vmatpush.msra.mxu0 %v220
    %408 = vmatmul.f32.gmra.mxu0 %v153
    %v409 = vpop.f32.mrf.mxu0
    %v410 = vadd.f32 %v390, %v409
    %411 = vdwg.mxu0
    %412 = vmatpush.msra.mxu0 %v217
    %413 = vmatpush.msra.mxu0 %v213
    %414 = vmatpush.msra.mxu0 %v209
    %415 = vmatpush.msra.mxu0 %v205
    %416 = vmatpush.msra.mxu0 %v201
    %417 = vmatpush.msra.mxu0 %v197
    %418 = vmatpush.msra.mxu0 %v193
    %419 = vmatpush.msra.mxu0 %v189
    %420 = vmatpush.msra.mxu0 %v185
    %421 = vmatpush.msra.mxu0 %v181
    %422 = vmatpush.msra.mxu0 %v177
    %423 = vmatpush.msra.mxu0 %v173
    %424 = vmatpush.msra.mxu0 %v169
    %425 = vmatpush.msra.mxu0 %v165
    %426 = vmatpush.msra.mxu0 %v161
    %427 = vmatpush.msra.mxu0 %v157
    %428 = vmatmul.f32.gmra.mxu0 %v152
    %v429 = vpop.f32.mrf.mxu0
    %v430 = vadd.f32 %v287, %v429
    %431 = vdwg.mxu0
    %432 = vmatpush.msra.mxu0 %v281
    %433 = vmatpush.msra.mxu0 %v277
    %434 = vmatpush.msra.mxu0 %v273
    %435 = vmatpush.msra.mxu0 %v269
    %436 = vmatpush.msra.mxu0 %v265
    %437 = vmatpush.msra.mxu0 %v261
    %438 = vmatpush.msra.mxu0 %v257
    %439 = vmatpush.msra.mxu0 %v253
    %440 = vmatpush.msra.mxu0 %v249
    %441 = vmatpush.msra.mxu0 %v245
    %442 = vmatpush.msra.mxu0 %v241
    %443 = vmatpush.msra.mxu0 %v237
    %444 = vmatpush.msra.mxu0 %v233
    %445 = vmatpush.msra.mxu0 %v229
    %446 = vmatpush.msra.mxu0 %v225
    %447 = vmatpush.msra.mxu0 %v221
    %448 = vmatmul.f32.gmra.mxu0 %v153
    %v449 = vpop.f32.mrf.mxu0
    %v450 = vadd.f32 %v430, %v449
    %451 = vdwg.mxu0
    %v452 = vmax.f32 %v330, 0.0
    %v453 = vmax.f32 %v370, 0.0
    %v454 = vmax.f32 %v410, 0.0
    %v455 = vmax.f32 %v450, 0.0
    %v456 = vld [vmem:[#allocation6] sm:$0xff]
    %v457 = vld [vmem:[#allocation6 + $0x8] sm:$0xff]
    %v458 = vld [vmem:[#allocation6 + $0x10] sm:$0xff]
    %v459 = vld [vmem:[#allocation6 + $0x18] sm:$0xff]
    %v460 = vld [vmem:[#allocation6 + $0x20] sm:$0xff]
    %v461 = vld [vmem:[#allocation6 + $0x28] sm:$0xff]
    %v462 = vld [vmem:[#allocation6 + $0x30] sm:$0xff]
    %v463 = vld [vmem:[#allocation6 + $0x38] sm:$0xff]
    %v464 = vld [vmem:[#allocation6 + $0x40] sm:$0xff]
    %v465 = vld [vmem:[#allocation6 + $0x48] sm:$0xff]
    %v466 = vld [vmem:[#allocation6 + $0x50] sm:$0xff]
    %v467 = vld [vmem:[#allocation6 + $0x58] sm:$0xff]
    %v468 = vld [vmem:[#allocation6 + $0x60] sm:$0xff]
    %v469 = vld [vmem:[#allocation6 + $0x68] sm:$0xff]
    %v470 = vld [vmem:[#allocation6 + $0x70] sm:$0xff]
    %v471 = vld [vmem:[#allocation6 + $0x78] sm:$0xff]
    %v472 = vld [vmem:[#allocation6 + $0x80] sm:$0xff]
    %v473 = vld [vmem:[#allocation6 + $0x88] sm:$0xff]
    %v474 = vld [vmem:[#allocation6 + $0x90] sm:$0xff]
    %v475 = vld [vmem:[#allocation6 + $0x98] sm:$0xff]
    %v476 = vld [vmem:[#allocation6 + $0xa0] sm:$0xff]
    %v477 = vld [vmem:[#allocation6 + $0xa8] sm:$0xff]
    %v478 = vld [vmem:[#allocation6 + $0xb0] sm:$0xff]
    %v479 = vld [vmem:[#allocation6 + $0xb8] sm:$0xff]
    %v480 = vld [vmem:[#allocation6 + $0xc0] sm:$0xff]
    %v481 = vld [vmem:[#allocation6 + $0xc8] sm:$0xff]
    %v482 = vld [vmem:[#allocation6 + $0xd0] sm:$0xff]
    %v483 = vld [vmem:[#allocation6 + $0xd8] sm:$0xff]
    %v484 = vld [vmem:[#allocation6 + $0xe0] sm:$0xff]
    %v485 = vld [vmem:[#allocation6 + $0xe8] sm:$0xff]
    %v486 = vld [vmem:[#allocation6 + $0xf0] sm:$0xff]
    %v487 = vld [vmem:[#allocation6 + $0xf8] sm:$0xff]
    %v488 = vld [vmem:[#allocation6 + $0x100] sm:$0xff]
    %v489 = vld [vmem:[#allocation6 + $0x108] sm:$0xff]
    %v490 = vld [vmem:[#allocation6 + $0x110] sm:$0xff]
    %v491 = vld [vmem:[#allocation6 + $0x118] sm:$0xff]
    %v492 = vld [vmem:[#allocation6 + $0x120] sm:$0xff]
    %v493 = vld [vmem:[#allocation6 + $0x128] sm:$0xff]
    %v494 = vld [vmem:[#allocation6 + $0x130] sm:$0xff]
    %v495 = vld [vmem:[#allocation6 + $0x138] sm:$0xff]
    %v496 = vld [vmem:[#allocation6 + $0x140] sm:$0xff]
    %v497 = vld [vmem:[#allocation6 + $0x148] sm:$0xff]
    %v498 = vld [vmem:[#allocation6 + $0x150] sm:$0xff]
    %v499 = vld [vmem:[#allocation6 + $0x158] sm:$0xff]
    %v500 = vld [vmem:[#allocation6 + $0x160] sm:$0xff]
    %v501 = vld [vmem:[#allocation6 + $0x168] sm:$0xff]
    %v502 = vld [vmem:[#allocation6 + $0x170] sm:$0xff]
    %v503 = vld [vmem:[#allocation6 + $0x178] sm:$0xff]
    %v504 = vld [vmem:[#allocation6 + $0x180] sm:$0xff]
    %v505 = vld [vmem:[#allocation6 + $0x188] sm:$0xff]
    %v506 = vld [vmem:[#allocation6 + $0x190] sm:$0xff]
    %v507 = vld [vmem:[#allocation6 + $0x198] sm:$0xff]
    %v508 = vld [vmem:[#allocation6 + $0x1a0] sm:$0xff]
    %v509 = vld [vmem:[#allocation6 + $0x1a8] sm:$0xff]
    %v510 = vld [vmem:[#allocation6 + $0x1b0] sm:$0xff]
    %v511 = vld [vmem:[#allocation6 + $0x1b8] sm:$0xff]
    %v512 = vld [vmem:[#allocation6 + $0x1c0] sm:$0xff]
    %v513 = vld [vmem:[#allocation6 + $0x1c8] sm:$0xff]
    %v514 = vld [vmem:[#allocation6 + $0x1d0] sm:$0xff]
    %v515 = vld [vmem:[#allocation6 + $0x1d8] sm:$0xff]
    %v516 = vld [vmem:[#allocation6 + $0x1e0] sm:$0xff]
    %v517 = vld [vmem:[#allocation6 + $0x1e8] sm:$0xff]
    %v518 = vld [vmem:[#allocation6 + $0x1f0] sm:$0xff]
    %v519 = vld [vmem:[#allocation6 + $0x1f8] sm:$0xff]
    %v520 = vld [vmem:[#allocation6 + $0x200] sm:$0xff]
    %v521 = vld [vmem:[#allocation6 + $0x208] sm:$0xff]
    %v522 = vld [vmem:[#allocation6 + $0x210] sm:$0xff]
    %v523 = vld [vmem:[#allocation6 + $0x218] sm:$0xff]
    %v524 = vld [vmem:[#allocation6 + $0x220] sm:$0xff]
    %v525 = vld [vmem:[#allocation6 + $0x228] sm:$0xff]
    %v526 = vld [vmem:[#allocation6 + $0x230] sm:$0xff]
    %v527 = vld [vmem:[#allocation6 + $0x238] sm:$0xff]
    %v528 = vld [vmem:[#allocation6 + $0x240] sm:$0xff]
    %v529 = vld [vmem:[#allocation6 + $0x248] sm:$0xff]
    %v530 = vld [vmem:[#allocation6 + $0x250] sm:$0xff]
    %v531 = vld [vmem:[#allocation6 + $0x258] sm:$0xff]
    %v532 = vld [vmem:[#allocation6 + $0x260] sm:$0xff]
    %v533 = vld [vmem:[#allocation6 + $0x268] sm:$0xff]
    %v534 = vld [vmem:[#allocation6 + $0x270] sm:$0xff]
    %v535 = vld [vmem:[#allocation6 + $0x278] sm:$0xff]
    %v536 = vld [vmem:[#allocation6 + $0x280] sm:$0xff]
    %v537 = vld [vmem:[#allocation6 + $0x288] sm:$0xff]
    %v538 = vld [vmem:[#allocation6 + $0x290] sm:$0xff]
    %v539 = vld [vmem:[#allocation6 + $0x298] sm:$0xff]
    %v540 = vld [vmem:[#allocation6 + $0x2a0] sm:$0xff]
    %v541 = vld [vmem:[#allocation6 + $0x2a8] sm:$0xff]
    %v542 = vld [vmem:[#allocation6 + $0x2b0] sm:$0xff]
    %v543 = vld [vmem:[#allocation6 + $0x2b8] sm:$0xff]
    %v544 = vld [vmem:[#allocation6 + $0x2c0] sm:$0xff]
    %v545 = vld [vmem:[#allocation6 + $0x2c8] sm:$0xff]
    %v546 = vld [vmem:[#allocation6 + $0x2d0] sm:$0xff]
    %v547 = vld [vmem:[#allocation6 + $0x2d8] sm:$0xff]
    %v548 = vld [vmem:[#allocation6 + $0x2e0] sm:$0xff]
    %v549 = vld [vmem:[#allocation6 + $0x2e8] sm:$0xff]
    %v550 = vld [vmem:[#allocation6 + $0x2f0] sm:$0xff]
    %v551 = vld [vmem:[#allocation6 + $0x2f8] sm:$0xff]
    %v552 = vld [vmem:[#allocation6 + $0x300] sm:$0xff]
    %v553 = vld [vmem:[#allocation6 + $0x308] sm:$0xff]
    %v554 = vld [vmem:[#allocation6 + $0x310] sm:$0xff]
    %v555 = vld [vmem:[#allocation6 + $0x318] sm:$0xff]
    %v556 = vld [vmem:[#allocation6 + $0x320] sm:$0xff]
    %v557 = vld [vmem:[#allocation6 + $0x328] sm:$0xff]
    %v558 = vld [vmem:[#allocation6 + $0x330] sm:$0xff]
    %v559 = vld [vmem:[#allocation6 + $0x338] sm:$0xff]
    %v560 = vld [vmem:[#allocation6 + $0x340] sm:$0xff]
    %v561 = vld [vmem:[#allocation6 + $0x348] sm:$0xff]
    %v562 = vld [vmem:[#allocation6 + $0x350] sm:$0xff]
    %v563 = vld [vmem:[#allocation6 + $0x358] sm:$0xff]
    %v564 = vld [vmem:[#allocation6 + $0x360] sm:$0xff]
    %v565 = vld [vmem:[#allocation6 + $0x368] sm:$0xff]
    %v566 = vld [vmem:[#allocation6 + $0x370] sm:$0xff]
    %v567 = vld [vmem:[#allocation6 + $0x378] sm:$0xff]
    %v568 = vld [vmem:[#allocation6 + $0x380] sm:$0xff]
    %v569 = vld [vmem:[#allocation6 + $0x388] sm:$0xff]
    %v570 = vld [vmem:[#allocation6 + $0x390] sm:$0xff]
    %v571 = vld [vmem:[#allocation6 + $0x398] sm:$0xff]
    %v572 = vld [vmem:[#allocation6 + $0x3a0] sm:$0xff]
    %v573 = vld [vmem:[#allocation6 + $0x3a8] sm:$0xff]
    %v574 = vld [vmem:[#allocation6 + $0x3b0] sm:$0xff]
    %v575 = vld [vmem:[#allocation6 + $0x3b8] sm:$0xff]
    %v576 = vld [vmem:[#allocation6 + $0x3c0] sm:$0xff]
    %v577 = vld [vmem:[#allocation6 + $0x3c8] sm:$0xff]
    %v578 = vld [vmem:[#allocation6 + $0x3d0] sm:$0xff]
    %v579 = vld [vmem:[#allocation6 + $0x3d8] sm:$0xff]
    %v580 = vld [vmem:[#allocation6 + $0x3e0] sm:$0xff]
    %v581 = vld [vmem:[#allocation6 + $0x3e8] sm:$0xff]
    %v582 = vld [vmem:[#allocation6 + $0x3f0] sm:$0xff]
    %v583 = vld [vmem:[#allocation6 + $0x3f8] sm:$0xff]
    %v584 = vld [vmem:[%s6] sm:$0x3]
    %v586 = vperm.slane %v584, 0
    %v587 = vperm.slane %v584, 1
    %590 = vmatpush.msra.mxu0 %v486
    %591 = vmatpush.msra.mxu0 %v484
    %592 = vmatpush.msra.mxu0 %v482
    %593 = vmatpush.msra.mxu0 %v480
    %594 = vmatpush.msra.mxu0 %v478
    %595 = vmatpush.msra.mxu0 %v476
    %596 = vmatpush.msra.mxu0 %v474
    %597 = vmatpush.msra.mxu0 %v472
    %598 = vmatpush.msra.mxu0 %v470
    %599 = vmatpush.msra.mxu0 %v468
    %600 = vmatpush.msra.mxu0 %v466
    %601 = vmatpush.msra.mxu0 %v464
    %602 = vmatpush.msra.mxu0 %v462
    %603 = vmatpush.msra.mxu0 %v460
    %604 = vmatpush.msra.mxu0 %v458
    %605 = vmatpush.msra.mxu0 %v456
    %606 = vmatmul.f32.gmra.mxu0 %v452
    %v607 = vpop.f32.mrf.mxu0
    %v608 = vadd.f32 %v586, %v607
    %609 = vdwg.mxu0
    %610 = vmatpush.msra.mxu0 %v518
    %611 = vmatpush.msra.mxu0 %v516
    %612 = vmatpush.msra.mxu0 %v514
    %613 = vmatpush.msra.mxu0 %v512
    %614 = vmatpush.msra.mxu0 %v510
    %615 = vmatpush.msra.mxu0 %v508
    %616 = vmatpush.msra.mxu0 %v506
    %617 = vmatpush.msra.mxu0 %v504
    %618 = vmatpush.msra.mxu0 %v502
    %619 = vmatpush.msra.mxu0 %v500
    %620 = vmatpush.msra.mxu0 %v498
    %621 = vmatpush.msra.mxu0 %v496
    %622 = vmatpush.msra.mxu0 %v494
    %623 = vmatpush.msra.mxu0 %v492
    %624 = vmatpush.msra.mxu0 %v490
    %625 = vmatpush.msra.mxu0 %v488
    %626 = vmatmul.f32.gmra.mxu0 %v453
    %v627 = vpop.f32.mrf.mxu0
    %v628 = vadd.f32 %v608, %v627
    %629 = vdwg.mxu0
    %630 = vmatpush.msra.mxu0 %v550
    %631 = vmatpush.msra.mxu0 %v548
    %632 = vmatpush.msra.mxu0 %v546
    %633 = vmatpush.msra.mxu0 %v544
    %634 = vmatpush.msra.mxu0 %v542
    %635 = vmatpush.msra.mxu0 %v540
    %636 = vmatpush.msra.mxu0 %v538
    %637 = vmatpush.msra.mxu0 %v536
    %638 = vmatpush.msra.mxu0 %v534
    %639 = vmatpush.msra.mxu0 %v532
    %640 = vmatpush.msra.mxu0 %v530
    %641 = vmatpush.msra.mxu0 %v528
    %642 = vmatpush.msra.mxu0 %v526
    %643 = vmatpush.msra.mxu0 %v524
    %644 = vmatpush.msra.mxu0 %v522
    %645 = vmatpush.msra.mxu0 %v520
    %646 = vmatmul.f32.gmra.mxu0 %v454
    %v647 = vpop.f32.mrf.mxu0
    %v648 = vadd.f32 %v628, %v647
    %649 = vdwg.mxu0
    %650 = vmatpush.msra.mxu0 %v582
    %651 = vmatpush.msra.mxu0 %v580
    %652 = vmatpush.msra.mxu0 %v578
    %653 = vmatpush.msra.mxu0 %v576
    %654 = vmatpush.msra.mxu0 %v574
    %655 = vmatpush.msra.mxu0 %v572
    %656 = vmatpush.msra.mxu0 %v570
    %657 = vmatpush.msra.mxu0 %v568
    %658 = vmatpush.msra.mxu0 %v566
    %659 = vmatpush.msra.mxu0 %v564
    %660 = vmatpush.msra.mxu0 %v562
    %661 = vmatpush.msra.mxu0 %v560
    %662 = vmatpush.msra.mxu0 %v558
    %663 = vmatpush.msra.mxu0 %v556
    %664 = vmatpush.msra.mxu0 %v554
    %665 = vmatpush.msra.mxu0 %v552
    %666 = vmatmul.f32.gmra.mxu0 %v455
    %v667 = vpop.f32.mrf.mxu0
    %v668 = vadd.f32 %v648, %v667
    %669 = vdwg.mxu0
    %670 = vmatpush.msra.mxu0 %v487
    %671 = vmatpush.msra.mxu0 %v485
    %672 = vmatpush.msra.mxu0 %v483
    %673 = vmatpush.msra.mxu0 %v481
    %674 = vmatpush.msra.mxu0 %v479
    %675 = vmatpush.msra.mxu0 %v477
    %676 = vmatpush.msra.mxu0 %v475
    %677 = vmatpush.msra.mxu0 %v473
    %678 = vmatpush.msra.mxu0 %v471
    %679 = vmatpush.msra.mxu0 %v469
    %680 = vmatpush.msra.mxu0 %v467
    %681 = vmatpush.msra.mxu0 %v465
    %682 = vmatpush.msra.mxu0 %v463
    %683 = vmatpush.msra.mxu0 %v461
    %684 = vmatpush.msra.mxu0 %v459
    %685 = vmatpush.msra.mxu0 %v457
    %686 = vmatmul.f32.gmra.mxu0 %v452
    %v687 = vpop.f32.mrf.mxu0
    %v688 = vadd.f32 %v587, %v687
    %689 = vdwg.mxu0
    %690 = vmatpush.msra.mxu0 %v519
    %691 = vmatpush.msra.mxu0 %v517
    %692 = vmatpush.msra.mxu0 %v515
    %693 = vmatpush.msra.mxu0 %v513
    %694 = vmatpush.msra.mxu0 %v511
    %695 = vmatpush.msra.mxu0 %v509
    %696 = vmatpush.msra.mxu0 %v507
    %697 = vmatpush.msra.mxu0 %v505
    %698 = vmatpush.msra.mxu0 %v503
    %699 = vmatpush.msra.mxu0 %v501
    %700 = vmatpush.msra.mxu0 %v499
    %701 = vmatpush.msra.mxu0 %v497
    %702 = vmatpush.msra.mxu0 %v495
    %703 = vmatpush.msra.mxu0 %v493
    %704 = vmatpush.msra.mxu0 %v491
    %705 = vmatpush.msra.mxu0 %v489
    %706 = vmatmul.f32.gmra.mxu0 %v453
    %v707 = vpop.f32.mrf.mxu0
    %v708 = vadd.f32 %v688, %v707
    %709 = vdwg.mxu0
    %710 = vmatpush.msra.mxu0 %v551
    %711 = vmatpush.msra.mxu0 %v549
    %712 = vmatpush.msra.mxu0 %v547
    %713 = vmatpush.msra.mxu0 %v545
    %714 = vmatpush.msra.mxu0 %v543
    %715 = vmatpush.msra.mxu0 %v541
    %716 = vmatpush.msra.mxu0 %v539
    %717 = vmatpush.msra.mxu0 %v537
    %718 = vmatpush.msra.mxu0 %v535
    %719 = vmatpush.msra.mxu0 %v533
    %720 = vmatpush.msra.mxu0 %v531
    %721 = vmatpush.msra.mxu0 %v529
    %722 = vmatpush.msra.mxu0 %v527
    %723 = vmatpush.msra.mxu0 %v525
    %724 = vmatpush.msra.mxu0 %v523
    %725 = vmatpush.msra.mxu0 %v521
    %726 = vmatmul.f32.gmra.mxu0 %v454
    %v727 = vpop.f32.mrf.mxu0
    %v728 = vadd.f32 %v708, %v727
    %729 = vdwg.mxu0
    %730 = vmatpush.msra.mxu0 %v583
    %731 = vmatpush.msra.mxu0 %v581
    %732 = vmatpush.msra.mxu0 %v579
    %733 = vmatpush.msra.mxu0 %v577
    %734 = vmatpush.msra.mxu0 %v575
    %735 = vmatpush.msra.mxu0 %v573
    %736 = vmatpush.msra.mxu0 %v571
    %737 = vmatpush.msra.mxu0 %v569
    %738 = vmatpush.msra.mxu0 %v567
    %739 = vmatpush.msra.mxu0 %v565
    %740 = vmatpush.msra.mxu0 %v563
    %741 = vmatpush.msra.mxu0 %v561
    %742 = vmatpush.msra.mxu0 %v559
    %743 = vmatpush.msra.mxu0 %v557
    %744 = vmatpush.msra.mxu0 %v555
    %745 = vmatpush.msra.mxu0 %v553
    %746 = vmatmul.f32.gmra.mxu0 %v455
    %v747 = vpop.f32.mrf.mxu0
    %v748 = vadd.f32 %v728, %v747
    %749 = vdwg.mxu0
    %v750 = vmax.f32 %v668, 0.0
    %v751 = vmax.f32 %v748, 0.0
    %752 = vst [vmem:[%s7] sm:$0xff] %v750
    %vm753 = vcmask 523264
    %754 = vst.msk [vmem:[%s7 + $0x8] sm:$0xff] %vm753, %v751
    // Predicated region
    $region42: #{_lambda_.1} parent=1 // pred_check
      _
    $region43: #{_lambda_.1} parent=1 // pred_check_branch
      %756 = sbr.rel (0) target = $region45
    $region44: #{_lambda_.1} parent=1 // pred_region
      _
    $region45: #{_lambda_.1} parent=1 // pred_fallthru
      _
    // Predicated region
    $region46: #{_lambda_.1} parent=1 // pred_check
      _
    $region47: #{_lambda_.1} parent=1 // pred_check_branch
      %758 = sbr.rel (0) target = $region49
    $region48: #{_lambda_.1} parent=1 // pred_region
      _
    $region49: #{_lambda_.1} parent=1 // pred_fallthru
      _
    %759 = vsyncpa [#allocation3], 1
    %760 = vsyncpa [#allocation5], 1

</llo_original>
